<compile_context>
chip_gen: v5e
topology: v5e:2x2
jax: 0.10.0
libtpu: 0.0.40
codegen_flags: <defaults>
</compile_context>

<pallas_src>
import functools

import jax
import jax.numpy as jnp
from jax import lax
from jax.experimental import pallas as pl
from jax.experimental.pallas import tpu as pltpu


# ------------------------- host-side weight preprocessing -------------------- #

def _conv3x3_band(w_hwio, W):
    """HWIO (3,3,Cin,Cout) -> (W*Cin, 3*W*Cout) block-banded matrix.

    Column block b (b = 0,1,2 <-> kernel row kh = b) maps an input row (length W*Cin)
    to its contribution z_b computed at the *input* row; output row h then sums
    z_b[h + b - 1].  The band encodes the three horizontal taps and zero-pads the
    W borders; the vertical taps / H borders are handled in-kernel by rolls + masks.
    """
    kh, kw, Cin, Cout = w_hwio.shape
    assert kh == 3 and kw == 3
    wp = jnp.arange(W)[:, None]          # input column w'
    wo = jnp.arange(W)[None, :]          # output column w
    dw = wp - wo + 1                     # kernel column index, valid in [0, 2]
    valid = (dw >= 0) & (dw <= 2)
    dwc = jnp.clip(dw, 0, 2)
    blocks = []
    for b in range(3):
        g = w_hwio[b][dwc]                                   # (W, W, Cin, Cout)
        g = jnp.where(valid[:, :, None, None], g, 0.0)
        blocks.append(jnp.transpose(g, (0, 2, 1, 3)).reshape(W * Cin, W * Cout))
    return jnp.concatenate(blocks, axis=1)                   # (W*Cin, 3*W*Cout)


def _conv1x1_blockdiag(w_hwio, W):
    """HWIO (1,1,Cin,Cout) -> block-diagonal (W*Cin, W*Cout) matrix."""
    ws = w_hwio[0, 0]                                        # (Cin, Cout)
    eye = jnp.eye(W, dtype=ws.dtype)
    return jnp.einsum("ij,cd->icjd", eye, ws).reshape(W * ws.shape[0],
                                                      W * ws.shape[1])


# ----------------------------- fused Pallas kernel --------------------------- #

def _fused_block_kernel(x_ref, s1_ref, b1_ref, b2_ref, w1_ref, w2_ref, o_ref, *,
                        H, WCout, equal_in_out):
    x = x_ref[...]                                            # (N*H, W*Cin) f32
    xa = jnp.maximum(x * s1_ref[...] + b1_ref[...], 0.0)      # relu(bn1(x)), f32/VPU

    NH = x.shape[0]
    # Per-image vertical boundary masks (also kill the roll's wrap-around rows).
    h_img = lax.broadcasted_iota(jnp.int32, (NH, WCout), 0) % H
    not_top = h_img != 0              # input row h-1 exists inside the same image
    not_bot = h_img != H - 1          # input row h+1 exists inside the same image

    def vtaps(z):
        # out[h] = z0[h-1] + z1[h] + z2[h+1], zero-filled across image/H borders.
        z0 = z[:, :WCout]
        z1 = z[:, WCout:2 * WCout]
        z2 = z[:, 2 * WCout:3 * WCout]
        dn = jnp.where(not_top, pltpu.roll(z0, shift=1, axis=0), 0.0)       # z0[h-1]
        up = jnp.where(not_bot, pltpu.roll(z2, shift=NH - 1, axis=0), 0.0)  # z2[h+1]
        return dn + z1 + up                                   # XLU rolls + VPU adds

    # conv1 taps (bn2 scale pre-folded into columns) + fused 1x1 shortcut columns:
    # a single wide bf16 MXU matmul, f32 accumulation.
    z1m = jnp.dot(xa.astype(jnp.bfloat16), w1_ref[...],
                  preferred_element_type=jnp.float32)
    h1 = jnp.maximum(vtaps(z1m) + b2_ref[...], 0.0)           # relu(bn2(conv1(.)))
    # TODO(synk): dropout path for drop_rate > 0 not implemented (identity at 0.0).

    z2m = jnp.dot(h1.astype(jnp.bfloat16), w2_ref[...],
                  preferred_element_type=jnp.float32)
    c2 = vtaps(z2m)                                           # conv2 output

    if equal_in_out:
        res = x                                               # torch.add(x, out)
    else:
        res = z1m[:, 3 * WCout:4 * WCout]                     # convShortcut(relu(bn1(x)))
    o_ref[...] = (res + c2).astype(o_ref.dtype)


# ------------------------------ BasicBlock forward --------------------------- #

def basic_block_forward(x_nhwc, params, *, equal_in_out, drop_rate=0.0):
    """Pallas implementation of BasicBlock.forward (stride=1, inference BN)."""
    assert drop_rate == 0.0, "dropout not implemented"
    eps = 1e-5
    N, H, W, Cin = x_nhwc.shape
    Cout = params["conv1_w"].shape[-1]
    WCin, WCout = W * Cin, W * Cout
    if equal_in_out:
        assert Cin == Cout, "equal_in_out=True requires in_planes == out_planes"

    # Fold BN affine + running stats into per-channel scale/bias (f32).
    s1 = params["bn1_gamma"] * lax.rsqrt(params["bn1_var"] + eps)
    b1 = params["bn1_beta"] - params["bn1_mean"] * s1
    s2 = params["bn2_gamma"] * lax.rsqrt(params["bn2_var"] + eps)
    b2 = params["bn2_beta"] - params["bn2_mean"] * s2

    # Stacked, lane-dense activation layout: (N*H, W*C).  Single kernel invocation.
    x2d = x_nhwc.reshape(N * H, WCin).astype(jnp.float32)
    s1_t = jnp.tile(s1, W).reshape(1, WCin)
    b1_t = jnp.tile(b1, W).reshape(1, WCin)
    b2_t = jnp.tile(b2, W).reshape(1, WCout)

    # conv1 band with bn2's scale folded into the output channels (conv is linear);
    # the 1x1 shortcut (unscaled) is concatenated as extra columns -> one RHS.
    band1 = _conv3x3_band(params["conv1_w"] * s2, W)          # (W*Cin, 3*W*Cout)
    if not equal_in_out:
        sc = _conv1x1_blockdiag(params["convs_w"], W)         # (W*Cin, W*Cout)
        band1 = jnp.concatenate([band1, sc], axis=1)          # (W*Cin, 4*W*Cout)
    band2 = _conv3x3_band(params["conv2_w"], W)               # (W*Cout, 3*W*Cout)

    # bf16 MXU operands (weights), f32 accumulation inside the kernel.
    w1 = band1.astype(jnp.bfloat16)
    w2 = band2.astype(jnp.bfloat16)

    kernel = functools.partial(_fused_block_kernel, H=H, WCout=WCout,
                               equal_in_out=equal_in_out)
    out = pl.pallas_call(
        kernel,
        out_shape=jax.ShapeDtypeStruct((N * H, WCout), x_nhwc.dtype),
        # No grid: the whole toy-sized problem fits VMEM in one step, avoiding
        # per-step overhead and duplicated weight DMA (single-TC v5e/v6e; on v7x the
        # 2-TC split is not worth it at ~1 us of compute).  See scaling TODO above.
    )(x2d, s1_t, b1_t, b2_t, w1, w2)
    return out.reshape(N, H, W, Cout)


# ------------------------------ reference (plain JAX) ------------------------ #

def _ref_bn_relu(x, g, b, m, v, eps=1e-5):
    return jnp.maximum((x - m) * g / jnp.sqrt(v + eps) + b, 0.0)


def _ref_conv(x, w):
    return lax.conv_general_dilated(
        x, w, window_strides=(1, 1), padding="SAME",
        dimension_numbers=("NHWC", "HWIO", "NHWC"))


def ref_forward(x_nhwc, params, *, equal_in_out):
    x_act = _ref_bn_relu(x_nhwc, params["bn1_gamma"], params["bn1_beta"],
                         params["bn1_mean"], params["bn1_var"])
    out = _ref_conv(x_act, params["conv1_w"])
    out = _ref_bn_relu(out, params["bn2_gamma"], params["bn2_beta"],
                       params["bn2_mean"], params["bn2_var"])
    out = _ref_conv(out, params["conv2_w"])
    residual = x_nhwc if equal_in_out else _ref_conv(x_act, params["convs_w"])
    return residual + out


# ----------------------------------- demo ----------------------------------- #

if __name__ == "__main__":
    in_planes, out_planes, stride, drop_rate = 4, 8, 1, 0.0
    assert stride == 1, "only stride=1 path implemented"
    equal_in_out = (in_planes == out_planes)

    N, H, W = 2, 16, 16
    key = jax.random.PRNGKey(0)
    keys = jax.random.split(key, 12)

    # Deterministic synthetic parameters (HWIO conv weights).
    params = {
        "conv1_w": 0.1 * jax.random.normal(keys[0], (3, 3, in_planes, out_planes), jnp.float32),
        "conv2_w": 0.1 * jax.random.normal(keys[1], (3, 3, out_planes, out_planes), jnp.float32),
        "convs_w": 0.1 * jax.random.normal(keys[2], (1, 1, in_planes, out_planes), jnp.float32),
        "bn1_gamma": 1.0 + 0.1 * jax.random.normal(keys[3], (in_planes,), jnp.float32),
        "bn1_beta": 0.1 * jax.random.normal(keys[4], (in_planes,), jnp.float32),
        "bn1_mean": 0.1 * jax.random.normal(keys[5], (in_planes,), jnp.float32),
        "bn1_var": 0.5 + jnp.abs(jax.random.normal(keys[6], (in_planes,), jnp.float32)),
        "bn2_gamma": 1.0 + 0.1 * jax.random.normal(keys[7], (out_planes,), jnp.float32),
        "bn2_beta": 0.1 * jax.random.normal(keys[8], (out_planes,), jnp.float32),
        "bn2_mean": 0.1 * jax.random.normal(keys[9], (out_planes,), jnp.float32),
        "bn2_var": 0.5 + jnp.abs(jax.random.normal(keys[10], (out_planes,), jnp.float32)),
    }

    # Input in PyTorch NCHW, transposed to NHWC for the kernel (layout glue only).
    x_nchw = jax.random.normal(keys[11], (N, in_planes, H, W), jnp.float32)
    x_nhwc = jnp.transpose(x_nchw, (0, 2, 3, 1))

    out = basic_block_forward(x_nhwc, params, equal_in_out=equal_in_out,
                              drop_rate=drop_rate)
    out = jax.block_until_ready(out)

    ref = ref_forward(x_nhwc, params, equal_in_out=equal_in_out)
    assert out.shape == (N, H, W, out_planes)
    # bf16 MXU operands with f32 accumulation vs an all-f32 reference -> 2e-2 tolerance.
    assert jnp.allclose(out, ref, rtol=2e-2, atol=2e-2), "mismatch vs JAX reference"

    print("KERNEL_OK")
</pallas_src>

<mosaic_0001>
module attributes {stable_mosaic.version = 11 : i64} {
  func.func @_fused_block_kernel(%arg0: memref<32x64xf32, #tpu.memory_space<vmem>>, %arg1: memref<1x64xf32, #tpu.memory_space<vmem>>, %arg2: memref<1x64xf32, #tpu.memory_space<vmem>>, %arg3: memref<1x128xf32, #tpu.memory_space<vmem>>, %arg4: memref<64x512xbf16, #tpu.memory_space<vmem>>, %arg5: memref<128x384xbf16, #tpu.memory_space<vmem>>, %arg6: memref<32x128xf32, #tpu.memory_space<vmem>>) attributes {dimension_semantics = [], scalar_prefetch = 0 : i64, scratch_operands = 0 : i64, tpu.core_type = #tpu.core_type<tc>} {
    %c0 = arith.constant 0 : index
    %c0_0 = arith.constant 0 : index
    %0 = vector.load %arg0[%c0, %c0_0] : memref<32x64xf32, #tpu.memory_space<vmem>>, vector<32x64xf32>
    %c0_1 = arith.constant 0 : index
    %c0_2 = arith.constant 0 : index
    %1 = vector.load %arg1[%c0_1, %c0_2] : memref<1x64xf32, #tpu.memory_space<vmem>>, vector<1x64xf32>
    %2 = vector.broadcast %1 : vector<1x64xf32> to vector<32x64xf32>
    %3 = arith.mulf %0, %2 : vector<32x64xf32>
    %c0_3 = arith.constant 0 : index
    %c0_4 = arith.constant 0 : index
    %4 = vector.load %arg2[%c0_3, %c0_4] : memref<1x64xf32, #tpu.memory_space<vmem>>, vector<1x64xf32>
    %5 = vector.broadcast %4 : vector<1x64xf32> to vector<32x64xf32>
    %6 = arith.addf %3, %5 : vector<32x64xf32>
    %cst = arith.constant 0.000000e+00 : f32
    %7 = vector.broadcast %cst : f32 to vector<32x64xf32>
    %8 = arith.maximumf %6, %7 : vector<32x64xf32>
    %9 = tpu.iota {dimensions = array<i32: 0>} : vector<32x128xi32>
    %c16_i32 = arith.constant 16 : i32
    %c0_i32 = arith.constant 0 : i32
    %10 = arith.cmpi eq, %c16_i32, %c0_i32 : i32
    %c1_i32 = arith.constant 1 : i32
    %11 = arith.select %10, %c1_i32, %c16_i32 : i32
    %12 = vector.broadcast %11 : i32 to vector<32x128xi32>
    %13 = arith.remsi %9, %12 : vector<32x128xi32>
    %c0_i32_5 = arith.constant 0 : i32
    %14 = vector.broadcast %c0_i32_5 : i32 to vector<32x128xi32>
    %15 = arith.cmpi ne, %13, %14 : vector<32x128xi32>
    %c0_i32_6 = arith.constant 0 : i32
    %16 = vector.broadcast %c0_i32_6 : i32 to vector<32x128xi32>
    %17 = arith.cmpi slt, %13, %16 : vector<32x128xi32>
    %c0_i32_7 = arith.constant 0 : i32
    %18 = arith.cmpi slt, %11, %c0_i32_7 : i32
    %19 = vector.broadcast %18 : i1 to vector<32x128xi1>
    %20 = vector.broadcast %19 : vector<32x128xi1> to vector<32x128xi1>
    %21 = arith.xori %17, %20 : vector<32x128xi1>
    %22 = arith.andi %21, %15 : vector<32x128xi1>
    %23 = vector.broadcast %11 : i32 to vector<32x128xi32>
    %24 = arith.addi %13, %23 : vector<32x128xi32>
    %25 = arith.select %22, %24, %13 : vector<32x128xi1>, vector<32x128xi32>
    %c0_i32_8 = arith.constant 0 : i32
    %26 = vector.broadcast %c0_i32_8 : i32 to vector<32x128xi32>
    %27 = arith.cmpi ne, %25, %26 : vector<32x128xi32>
    %c15_i32 = arith.constant 15 : i32
    %28 = vector.broadcast %c15_i32 : i32 to vector<32x128xi32>
    %29 = arith.cmpi ne, %25, %28 : vector<32x128xi32>
    %30 = arith.truncf %8 : vector<32x64xf32> to vector<32x64xbf16>
    %c0_9 = arith.constant 0 : index
    %c0_10 = arith.constant 0 : index
    %31 = vector.load %arg4[%c0_9, %c0_10] : memref<64x512xbf16, #tpu.memory_space<vmem>>, vector<64x512xbf16>
    %cst_11 = arith.constant dense<0.000000e+00> : vector<32x512xf32>
    %32 = tpu.matmul %30, %31, %cst_11 {dimension_numbers = #tpu.dot_dimension_numbers<[1], [0], [0], [1], [0, 0, 1, 1], [], []>} : vector<32x64xbf16>, vector<64x512xbf16>, vector<32x512xf32> -> vector<32x512xf32>
    %33 = vector.extract_strided_slice %32 {offsets = [0, 0], sizes = [32, 128], strides = [1, 1]} : vector<32x512xf32> to vector<32x128xf32>
    %34 = vector.extract_strided_slice %32 {offsets = [0, 128], sizes = [32, 128], strides = [1, 1]} : vector<32x512xf32> to vector<32x128xf32>
    %35 = vector.extract_strided_slice %32 {offsets = [0, 256], sizes = [32, 128], strides = [1, 1]} : vector<32x512xf32> to vector<32x128xf32>
    %c1_i32_12 = arith.constant 1 : i32
    %36 = tpu.dynamic_rotate %33 by %c1_i32_12 dim 0 : vector<32x128xf32>, i32 -> vector<32x128xf32>
    %cst_13 = arith.constant 0.000000e+00 : f32
    %37 = vector.broadcast %cst_13 : f32 to vector<32x128xf32>
    %38 = arith.select %27, %36, %37 : vector<32x128xi1>, vector<32x128xf32>
    %c31_i32 = arith.constant 31 : i32
    %39 = tpu.dynamic_rotate %35 by %c31_i32 dim 0 : vector<32x128xf32>, i32 -> vector<32x128xf32>
    %cst_14 = arith.constant 0.000000e+00 : f32
    %40 = vector.broadcast %cst_14 : f32 to vector<32x128xf32>
    %41 = arith.select %29, %39, %40 : vector<32x128xi1>, vector<32x128xf32>
    %42 = arith.addf %38, %34 : vector<32x128xf32>
    %43 = arith.addf %42, %41 : vector<32x128xf32>
    %c0_15 = arith.constant 0 : index
    %c0_16 = arith.constant 0 : index
    %44 = vector.load %arg3[%c0_15, %c0_16] : memref<1x128xf32, #tpu.memory_space<vmem>>, vector<1x128xf32>
    %45 = vector.broadcast %44 : vector<1x128xf32> to vector<32x128xf32>
    %46 = arith.addf %43, %45 : vector<32x128xf32>
    %cst_17 = arith.constant 0.000000e+00 : f32
    %47 = vector.broadcast %cst_17 : f32 to vector<32x128xf32>
    %48 = arith.maximumf %46, %47 : vector<32x128xf32>
    %49 = arith.truncf %48 : vector<32x128xf32> to vector<32x128xbf16>
    %c0_18 = arith.constant 0 : index
    %c0_19 = arith.constant 0 : index
    %50 = vector.load %arg5[%c0_18, %c0_19] : memref<128x384xbf16, #tpu.memory_space<vmem>>, vector<128x384xbf16>
    %cst_20 = arith.constant dense<0.000000e+00> : vector<32x384xf32>
    %51 = tpu.matmul %49, %50, %cst_20 {dimension_numbers = #tpu.dot_dimension_numbers<[1], [0], [0], [1], [0, 0, 1, 1], [], []>} : vector<32x128xbf16>, vector<128x384xbf16>, vector<32x384xf32> -> vector<32x384xf32>
    %52 = vector.extract_strided_slice %51 {offsets = [0, 0], sizes = [32, 128], strides = [1, 1]} : vector<32x384xf32> to vector<32x128xf32>
    %53 = vector.extract_strided_slice %51 {offsets = [0, 128], sizes = [32, 128], strides = [1, 1]} : vector<32x384xf32> to vector<32x128xf32>
    %54 = vector.extract_strided_slice %51 {offsets = [0, 256], sizes = [32, 128], strides = [1, 1]} : vector<32x384xf32> to vector<32x128xf32>
    %c1_i32_21 = arith.constant 1 : i32
    %55 = tpu.dynamic_rotate %52 by %c1_i32_21 dim 0 : vector<32x128xf32>, i32 -> vector<32x128xf32>
    %cst_22 = arith.constant 0.000000e+00 : f32
    %56 = vector.broadcast %cst_22 : f32 to vector<32x128xf32>
    %57 = arith.select %27, %55, %56 : vector<32x128xi1>, vector<32x128xf32>
    %c31_i32_23 = arith.constant 31 : i32
    %58 = tpu.dynamic_rotate %54 by %c31_i32_23 dim 0 : vector<32x128xf32>, i32 -> vector<32x128xf32>
    %cst_24 = arith.constant 0.000000e+00 : f32
    %59 = vector.broadcast %cst_24 : f32 to vector<32x128xf32>
    %60 = arith.select %29, %58, %59 : vector<32x128xi1>, vector<32x128xf32>
    %61 = arith.addf %57, %53 : vector<32x128xf32>
    %62 = arith.addf %61, %60 : vector<32x128xf32>
    %63 = vector.extract_strided_slice %32 {offsets = [0, 384], sizes = [32, 128], strides = [1, 1]} : vector<32x512xf32> to vector<32x128xf32>
    %64 = arith.addf %63, %62 : vector<32x128xf32>
    %c0_25 = arith.constant 0 : index
    %c0_26 = arith.constant 0 : index
    %65 = vector.load %arg6[%c0_25, %c0_26] : memref<32x128xf32, #tpu.memory_space<vmem>>, vector<32x128xf32>
    tpu.vector_store %arg6[%c0_25, %c0_26], %64 {strides = array<i32>} : memref<32x128xf32, #tpu.memory_space<vmem>>, vector<32x128xf32>,
    return
  }
}

</mosaic_0001>

<llo_original>
// kernel: tpu_custom_call.1
$region0: #{tpu_custom_call.1}
  #allocation0 [shape = 'u32[]', space=smem, size = 0x4, offset = 0x4, fixed_abs, tag = 'smem constant byte address 0x4 - core index']
  #allocation1 [shape = 'u32[72,128]{1,0:T(1,128)}', space=vmem, size = 0x9000, scoped, tag = 'internal scratch']
  %s0 = inlined_call_operand.hbm [shape: f32[32,64], index: 0, kind: input, shape index: {}]
  %s1 = inlined_call_operand.hbm [shape: f32[1,64], index: 1, kind: input, shape index: {}]
  %s2 = inlined_call_operand.vmem [shape: f32[1,64], index: 2, kind: input, shape index: {}]
  %s3 = inlined_call_operand.vmem [shape: f32[1,128], index: 3, kind: input, shape index: {}]
  %s4 = inlined_call_operand.hbm [shape: bf16[64,512], index: 4, kind: input, shape index: {}]
  %s5 = inlined_call_operand.hbm [shape: bf16[128,384], index: 5, kind: input, shape index: {}]
  %s6 = inlined_call_operand.hbm [shape: f32[32,128], index: 6, kind: output, shape index: {}]
  %s7 = sld [smem:[#allocation0]]
  $region50: #{tpu_custom_call.1} parent=0
    _
  %s9 = ssub.s32 1, %s7
  %s10 = scalar_select 0, %s9, %s7
  $region1: #{tpu_custom_call.1} parent=0
    #allocation2 [shape = 'u8[16384]{0}', space=vmem, size = 0x4000, scoped, tag = 'input window, operand 0, single buffered']
    #allocation3 [shape = 's32[1]{0}', space=sflag, size = 0x4, scoped, tag = 'scoped memory for tpu_custom_call.1']
    #allocation4 [shape = 's32[1]{0}', space=sflag, size = 0x4, scoped, tag = 'scoped memory for tpu_custom_call.1']
    #allocation5 [shape = 'u8[512]{0}', space=vmem, size = 0x400, scoped, tag = 'input window, operand 1, single buffered']
    #allocation6 [shape = 's32[1]{0}', space=sflag, size = 0x4, scoped, tag = 'scoped memory for tpu_custom_call.1']
    #allocation7 [shape = 'u8[65536]{0}', space=vmem, size = 0x10000, scoped, tag = 'input window, operand 4, single buffered']
    #allocation8 [shape = 'u8[98304]{0}', space=vmem, size = 0x18000, scoped, tag = 'input window, operand 5, single buffered']
    #allocation9 [shape = 's32[1]{0}', space=sflag, size = 0x4, scoped, tag = 'scoped memory for tpu_custom_call.1']
    #allocation10 [shape = 'u8[16384]{0}', space=vmem, size = 0x4000, scoped, tag = 'output window, operand 0, single buffered']
    %11 = vsyncpa [#allocation3], 0
    %12 = vsyncpa [#allocation6], 0
    %13 = vsyncpa [#allocation9], 0
    %14 = vsyncpa [#allocation4], 0
    // Predicated region
    $region2: #{tpu_custom_call.1} parent=1 // pred_check
      _
    $region3: #{tpu_custom_call.1} parent=1 // pred_check_branch
      %16 = sbr.rel (0) target = $region5
    $region4: #{tpu_custom_call.1} parent=1 // pred_region
      %18 = vsyncadd [#allocation3], 0
      %s19 = sshll.u32 %s0, 4
      %s20 = int_to_ptr.hbm [resolvable:$true] %s19
      %s21 = sshll.u32 [#allocation2], 4
      %s22 = int_to_ptr.vmem [resolvable:$true] %s21
      %27 = dma.hbm_to_vmem [thread:$0]  %s20, 512, %s22, [#allocation3], 128, 128, 8
    $region5: #{tpu_custom_call.1} parent=1 // pred_fallthru
      _
    // Predicated region
    $region6: #{tpu_custom_call.1} parent=1 // pred_check
      _
    $region7: #{tpu_custom_call.1} parent=1 // pred_check_branch
      %29 = sbr.rel (0) target = $region9
    $region8: #{tpu_custom_call.1} parent=1 // pred_region
      %31 = vsyncadd [#allocation6], 0
      %s33 = sshll.u32 %s1, 4
      %s34 = int_to_ptr.hbm [resolvable:$true] %s33
      %s35 = sshll.u32 [#allocation5], 4
      %s36 = int_to_ptr.vmem [resolvable:$true] %s35
      %38 = dma.hbm_to_vmem [thread:$0]  %s34, 16, %s36, [#allocation6]
    $region9: #{tpu_custom_call.1} parent=1 // pred_fallthru
      _
    // Predicated region
    $region10: #{tpu_custom_call.1} parent=1 // pred_check
      _
    $region11: #{tpu_custom_call.1} parent=1 // pred_check_branch
      %40 = sbr.rel (0) target = $region13
    $region12: #{tpu_custom_call.1} parent=1 // pred_region
      _
    $region13: #{tpu_custom_call.1} parent=1 // pred_fallthru
      _
    // Predicated region
    $region14: #{tpu_custom_call.1} parent=1 // pred_check
      _
    $region15: #{tpu_custom_call.1} parent=1 // pred_check_branch
      %42 = sbr.rel (0) target = $region17
    $region16: #{tpu_custom_call.1} parent=1 // pred_region
      _
    $region17: #{tpu_custom_call.1} parent=1 // pred_fallthru
      _
    // Predicated region
    $region18: #{tpu_custom_call.1} parent=1 // pred_check
      _
    $region19: #{tpu_custom_call.1} parent=1 // pred_check_branch
      %44 = sbr.rel (0) target = $region21
    $region20: #{tpu_custom_call.1} parent=1 // pred_region
      %46 = vsyncadd [#allocation6], 0
      %s47 = sshll.u32 %s4, 4
      %s48 = int_to_ptr.hbm [resolvable:$true] %s47
      %s49 = sshll.u32 [#allocation7], 4
      %s50 = int_to_ptr.vmem [resolvable:$true] %s49
      %55 = dma.hbm_to_vmem [thread:$0]  %s48, 2048, %s50, [#allocation6], 256, 256, 16
    $region21: #{tpu_custom_call.1} parent=1 // pred_fallthru
      _
    // Predicated region
    $region22: #{tpu_custom_call.1} parent=1 // pred_check
      _
    $region23: #{tpu_custom_call.1} parent=1 // pred_check_branch
      %57 = sbr.rel (0) target = $region25
    $region24: #{tpu_custom_call.1} parent=1 // pred_region
      %59 = vsyncadd [#allocation9], 0
      %s60 = sshll.u32 %s5, 4
      %s61 = int_to_ptr.hbm [resolvable:$true] %s60
      %s62 = sshll.u32 [#allocation8], 4
      %s63 = int_to_ptr.vmem [resolvable:$true] %s62
      %68 = dma.hbm_to_vmem [thread:$0]  %s61, 3072, %s63, [#allocation9], 192, 192, 12
    $region25: #{tpu_custom_call.1} parent=1 // pred_fallthru
      _
    // Predicated region
    $region26: #{tpu_custom_call.1} parent=1 // pred_check
      _
    $region27: #{tpu_custom_call.1} parent=1 // pred_check_branch
      %70 = sbr.rel (0) target = $region29
    $region28: #{tpu_custom_call.1} parent=1 // pred_region
      %72 = dma.done [#allocation3], 512
    $region29: #{tpu_custom_call.1} parent=1 // pred_fallthru
      _
    // Predicated region
    $region30: #{tpu_custom_call.1} parent=1 // pred_check
      _
    $region31: #{tpu_custom_call.1} parent=1 // pred_check_branch
      %74 = sbr.rel (0) target = $region33
    $region32: #{tpu_custom_call.1} parent=1 // pred_region
      %76 = dma.done [#allocation6], 16
    $region33: #{tpu_custom_call.1} parent=1 // pred_fallthru
      _
    // Predicated region
    $region34: #{tpu_custom_call.1} parent=1 // pred_check
      _
    $region35: #{tpu_custom_call.1} parent=1 // pred_check_branch
      %78 = sbr.rel (0) target = $region37
    $region36: #{tpu_custom_call.1} parent=1 // pred_region
      %80 = dma.done [#allocation6], 2048
    $region37: #{tpu_custom_call.1} parent=1 // pred_fallthru
      _
    // Predicated region
    $region38: #{tpu_custom_call.1} parent=1 // pred_check
      _
    $region39: #{tpu_custom_call.1} parent=1 // pred_check_branch
      %82 = sbr.rel (0) target = $region41
    $region40: #{tpu_custom_call.1} parent=1 // pred_region
      %84 = dma.done [#allocation9], 3072
    $region41: #{tpu_custom_call.1} parent=1 // pred_fallthru
      _
    %v86 = vld [vmem:[#allocation2] sm:$0xff]
    %v87 = vld [vmem:[#allocation2 + $0x8] sm:$0xff]
    %v88 = vld [vmem:[#allocation2 + $0x10] sm:$0xff]
    %v89 = vld [vmem:[#allocation2 + $0x18] sm:$0xff]
    %v90 = vld [vmem:[#allocation5] sm:$0x1]
    %v92 = vperm.slane %v90, 0
    %v94 = vmul.f32 %v86, %v92
    %v95 = vmul.f32 %v87, %v92
    %v96 = vmul.f32 %v88, %v92
    %v97 = vmul.f32 %v89, %v92
    %v98 = vld [vmem:[%s2] sm:$0x1]
    %v100 = vperm.slane %v98, 0
    %v102 = vadd.f32 %v94, %v100
    %v103 = vadd.f32 %v95, %v100
    %v104 = vadd.f32 %v96, %v100
    %v105 = vadd.f32 %v97, %v100
    %v106 = vmax.f32 %v102, 0.0
    %v107 = vmax.f32 %v103, 0.0
    %v108 = vmax.f32 %v104, 0.0
    %v109 = vmax.f32 %v105, 0.0
    %v110 = vlaneseq
    %v111 = vshrl.u32 %v110, 7
    %v112 = vadd.s32 %v111, 8
    %v113 = vadd.s32 %v111, 16
    %v114 = vadd.s32 %v111, 24
    %vm115 = vcmp.lt.s32.totalorder %v111, 0
    %v116 = vsub.s32 0, %v111
    %v117 = vsel %vm115, %v116, %v111
    %v118 = vshrl.u32 %v117, 4
    %v119 = vand.u32 %v117, 15
    %v120 = vsub.s32 0, %v119
    %v121 = vsel %vm115, %v120, %v119
    %vm122 = vcmp.lt.s32.totalorder %v112, 0
    %v123 = vsub.s32 0, %v112
    %v124 = vsel %vm122, %v123, %v112
    %v125 = vshrl.u32 %v124, 4
    %v126 = vand.u32 %v124, 15
    %v127 = vsub.s32 0, %v126
    %v128 = vsel %vm122, %v127, %v126
    %vm129 = vcmp.lt.s32.totalorder %v113, 0
    %v130 = vsub.s32 0, %v113
    %v131 = vsel %vm129, %v130, %v113
    %v132 = vshrl.u32 %v131, 4
    %v133 = vand.u32 %v131, 15
    %v134 = vsub.s32 0, %v133
    %v135 = vsel %vm129, %v134, %v133
    %vm136 = vcmp.lt.s32.totalorder %v114, 0
    %v137 = vsub.s32 0, %v114
    %v138 = vsel %vm136, %v137, %v114
    %v139 = vshrl.u32 %v138, 4
    %v140 = vand.u32 %v138, 15
    %v141 = vsub.s32 0, %v140
    %v142 = vsel %vm136, %v141, %v140
    %vm143 = vcmp.ne.s32.totalorder %v121, 0
    %vm144 = vcmp.ne.s32.totalorder %v128, 0
    %vm145 = vcmp.ne.s32.totalorder %v135, 0
    %vm146 = vcmp.ne.s32.totalorder %v142, 0
    %vm147 = vcmp.lt.s32.totalorder %v121, 0
    %vm148 = vcmp.lt.s32.totalorder %v128, 0
    %vm149 = vcmp.lt.s32.totalorder %v135, 0
    %vm150 = vcmp.lt.s32.totalorder %v142, 0
    %vm151 = vmand %vm147, %vm143
    %vm152 = vmand %vm148, %vm144
    %vm153 = vmand %vm149, %vm145
    %vm154 = vmand %vm150, %vm146
    %v155 = vadd.s32 %v121, 16
    %v156 = vadd.s32 %v128, 16
    %v157 = vadd.s32 %v135, 16
    %v158 = vadd.s32 %v142, 16
    %v159 = vsel %vm151, %v155, %v121
    %v160 = vsel %vm152, %v156, %v128
    %v161 = vsel %vm153, %v157, %v135
    %v162 = vsel %vm154, %v158, %v142
    %vm163 = vcmp.ne.s32.totalorder %v159, 0
    %vm164 = vcmp.ne.s32.totalorder %v160, 0
    %vm165 = vcmp.ne.s32.totalorder %v161, 0
    %vm166 = vcmp.ne.s32.totalorder %v162, 0
    %vm167 = vcmp.ne.s32.totalorder %v159, 15
    %vm168 = vcmp.ne.s32.totalorder %v160, 15
    %vm169 = vcmp.ne.s32.totalorder %v161, 15
    %vm170 = vcmp.ne.s32.totalorder %v162, 15
    %v171 = vpack.c.bf16 %v107, %v106
    %v172 = vpack.c.bf16 %v109, %v108
    %v173 = vld [vmem:[#allocation7] sm:$0xff]
    %v174 = vld [vmem:[#allocation7 + $0x8] sm:$0xff]
    %v175 = vld [vmem:[#allocation7 + $0x10] sm:$0xff]
    %v176 = vld [vmem:[#allocation7 + $0x18] sm:$0xff]
    %v177 = vld [vmem:[#allocation7 + $0x20] sm:$0xff]
    %v178 = vld [vmem:[#allocation7 + $0x28] sm:$0xff]
    %v179 = vld [vmem:[#allocation7 + $0x30] sm:$0xff]
    %v180 = vld [vmem:[#allocation7 + $0x38] sm:$0xff]
    %v181 = vld [vmem:[#allocation7 + $0x40] sm:$0xff]
    %v182 = vld [vmem:[#allocation7 + $0x48] sm:$0xff]
    %v183 = vld [vmem:[#allocation7 + $0x50] sm:$0xff]
    %v184 = vld [vmem:[#allocation7 + $0x58] sm:$0xff]
    %v185 = vld [vmem:[#allocation7 + $0x60] sm:$0xff]
    %v186 = vld [vmem:[#allocation7 + $0x68] sm:$0xff]
    %v187 = vld [vmem:[#allocation7 + $0x70] sm:$0xff]
    %v188 = vld [vmem:[#allocation7 + $0x78] sm:$0xff]
    %v205 = vunpack.c.l.b16 %v173
    %v206 = vunpack.c.h.b16 %v173
    %v207 = vunpack.c.l.b16 %v174
    %v208 = vunpack.c.h.b16 %v174
    %v209 = vunpack.c.l.b16 %v175
    %v210 = vunpack.c.h.b16 %v175
    %v211 = vunpack.c.l.b16 %v176
    %v212 = vunpack.c.h.b16 %v176
    %v213 = vunpack.c.l.b16 %v177
    %v214 = vunpack.c.h.b16 %v177
    %v215 = vunpack.c.l.b16 %v178
    %v216 = vunpack.c.h.b16 %v178
    %v217 = vunpack.c.l.b16 %v179
    %v218 = vunpack.c.h.b16 %v179
    %v219 = vunpack.c.l.b16 %v180
    %v220 = vunpack.c.h.b16 %v180
    %v221 = vunpack.c.l.b16 %v181
    %v222 = vunpack.c.h.b16 %v181
    %v223 = vunpack.c.l.b16 %v182
    %v224 = vunpack.c.h.b16 %v182
    %v225 = vunpack.c.l.b16 %v183
    %v226 = vunpack.c.h.b16 %v183
    %v227 = vunpack.c.l.b16 %v184
    %v228 = vunpack.c.h.b16 %v184
    %v229 = vunpack.c.l.b16 %v185
    %v230 = vunpack.c.h.b16 %v185
    %v231 = vunpack.c.l.b16 %v186
    %v232 = vunpack.c.h.b16 %v186
    %v233 = vunpack.c.l.b16 %v187
    %v234 = vunpack.c.h.b16 %v187
    %v235 = vunpack.c.l.b16 %v188
    %v236 = vunpack.c.h.b16 %v188
    %v237 = vpack.c.b16 %v209, %v205
    %v238 = vpack.c.b16 %v210, %v206
    %v239 = vpack.c.b16 %v211, %v207
    %v240 = vpack.c.b16 %v212, %v208
    %v241 = vpack.c.b16 %v217, %v213
    %v242 = vpack.c.b16 %v218, %v214
    %v243 = vpack.c.b16 %v219, %v215
    %v244 = vpack.c.b16 %v220, %v216
    %v245 = vpack.c.b16 %v225, %v221
    %v246 = vpack.c.b16 %v226, %v222
    %v247 = vpack.c.b16 %v227, %v223
    %v248 = vpack.c.b16 %v228, %v224
    %v249 = vpack.c.b16 %v233, %v229
    %v250 = vpack.c.b16 %v234, %v230
    %v251 = vpack.c.b16 %v235, %v231
    %v252 = vpack.c.b16 %v236, %v232
    %vm269 = vcmask 523264
    %v271 = vsel %vm269, %v171, 0
    %v274 = vsel %vm269, %v172, 0
    %276 = vmatpush.bf16.msra.mxu0 0
    %277 = vmatpush.bf16.msra.mxu0 0
    %278 = vmatpush.bf16.msra.mxu0 0
    %279 = vmatpush.bf16.msra.mxu0 0
    %280 = vmatpush.bf16.msra.mxu0 %v249
    %281 = vmatpush.bf16.msra.mxu0 %v245
    %282 = vmatpush.bf16.msra.mxu0 %v241
    %283 = vmatpush.bf16.msra.mxu0 %v237
    %284 = vmatmul.bf16.gmra.mxu0 %v271
    %v285 = vpop.f32.mrf.mxu0
    %v286 = vadd.f32 0.0, %v285
    %v287 = vpop.f32.mrf.mxu0
    %v288 = vadd.f32 0.0, %v287
    %289 = vmatmul.bf16.gmra.mxu0 %v274
    %v290 = vpop.f32.mrf.mxu0
    %v291 = vadd.f32 0.0, %v290
    %v292 = vpop.f32.mrf.mxu0
    %v293 = vadd.f32 0.0, %v292
    %294 = vdwg.mxu0
    %295 = vmatpush.bf16.msra.mxu0 0
    %296 = vmatpush.bf16.msra.mxu0 0
    %297 = vmatpush.bf16.msra.mxu0 0
    %298 = vmatpush.bf16.msra.mxu0 0
    %299 = vmatpush.bf16.msra.mxu0 %v250
    %300 = vmatpush.bf16.msra.mxu0 %v246
    %301 = vmatpush.bf16.msra.mxu0 %v242
    %302 = vmatpush.bf16.msra.mxu0 %v238
    %303 = vmatmul.bf16.gmra.mxu0 %v271
    %v304 = vpop.f32.mrf.mxu0
    %v305 = vadd.f32 0.0, %v304
    %v306 = vpop.f32.mrf.mxu0
    %v307 = vadd.f32 0.0, %v306
    %308 = vmatmul.bf16.gmra.mxu0 %v274
    %v309 = vpop.f32.mrf.mxu0
    %v310 = vadd.f32 0.0, %v309
    %v311 = vpop.f32.mrf.mxu0
    %v312 = vadd.f32 0.0, %v311
    %313 = vdwg.mxu0
    %314 = vmatpush.bf16.msra.mxu0 0
    %315 = vmatpush.bf16.msra.mxu0 0
    %316 = vmatpush.bf16.msra.mxu0 0
    %317 = vmatpush.bf16.msra.mxu0 0
    %318 = vmatpush.bf16.msra.mxu0 %v251
    %319 = vmatpush.bf16.msra.mxu0 %v247
    %320 = vmatpush.bf16.msra.mxu0 %v243
    %321 = vmatpush.bf16.msra.mxu0 %v239
    %322 = vmatmul.bf16.gmra.mxu0 %v271
    %v323 = vpop.f32.mrf.mxu0
    %v324 = vadd.f32 0.0, %v323
    %v325 = vpop.f32.mrf.mxu0
    %v326 = vadd.f32 0.0, %v325
    %327 = vmatmul.bf16.gmra.mxu0 %v274
    %v328 = vpop.f32.mrf.mxu0
    %v329 = vadd.f32 0.0, %v328
    %v330 = vpop.f32.mrf.mxu0
    %v331 = vadd.f32 0.0, %v330
    %332 = vdwg.mxu0
    %333 = vmatpush.bf16.msra.mxu0 0
    %334 = vmatpush.bf16.msra.mxu0 0
    %335 = vmatpush.bf16.msra.mxu0 0
    %336 = vmatpush.bf16.msra.mxu0 0
    %337 = vmatpush.bf16.msra.mxu0 %v252
    %338 = vmatpush.bf16.msra.mxu0 %v248
    %339 = vmatpush.bf16.msra.mxu0 %v244
    %340 = vmatpush.bf16.msra.mxu0 %v240
    %341 = vmatmul.bf16.gmra.mxu0 %v271
    %v342 = vpop.f32.mrf.mxu0
    %v343 = vadd.f32 0.0, %v342
    %v344 = vpop.f32.mrf.mxu0
    %v345 = vadd.f32 0.0, %v344
    %346 = vmatmul.bf16.gmra.mxu0 %v274
    %v347 = vpop.f32.mrf.mxu0
    %v348 = vadd.f32 0.0, %v347
    %v349 = vpop.f32.mrf.mxu0
    %v350 = vadd.f32 0.0, %v349
    %351 = vdwg.mxu0
    %v352 = vrot.slane %v286, 7
    %v353 = vrot.slane %v288, 7
    %v354 = vrot.slane %v291, 7
    %v355 = vrot.slane %v293, 7
    %vm356 = vcmp.lt.s32.totalorder %v111, 1
    %v357 = vsel %vm356, %v354, %v355
    %v358 = vsel %vm356, %v353, %v354
    %v359 = vsel %vm356, %v352, %v353
    %v360 = vsel %vm356, %v355, %v352
    %v361 = vsel %vm163, %v360, 0.0
    %v362 = vsel %vm164, %v359, 0.0
    %v363 = vsel %vm165, %v358, 0.0
    %v364 = vsel %vm166, %v357, 0.0
    %v365 = vrot.slane %v324, 1
    %v366 = vrot.slane %v326, 1
    %v367 = vrot.slane %v329, 1
    %v368 = vrot.slane %v331, 1
    %vm369 = vcmp.lt.s32.totalorder %v111, 7
    %v370 = vsel %vm369, %v367, %v368
    %v371 = vsel %vm369, %v366, %v367
    %v372 = vsel %vm369, %v365, %v366
    %v373 = vsel %vm369, %v368, %v365
    %v374 = vsel %vm167, %v372, 0.0
    %v375 = vsel %vm168, %v371, 0.0
    %v376 = vsel %vm169, %v370, 0.0
    %v377 = vsel %vm170, %v373, 0.0
    %v378 = vadd.f32 %v361, %v305
    %v379 = vadd.f32 %v362, %v307
    %v380 = vadd.f32 %v363, %v310
    %v381 = vadd.f32 %v364, %v312
    %v382 = vadd.f32 %v378, %v374
    %v383 = vadd.f32 %v379, %v375
    %v384 = vadd.f32 %v380, %v376
    %v385 = vadd.f32 %v381, %v377
    %v386 = vld [vmem:[%s3] sm:$0x1]
    %v388 = vperm.slane %v386, 0
    %v390 = vadd.f32 %v382, %v388
    %v391 = vadd.f32 %v383, %v388
    %v392 = vadd.f32 %v384, %v388
    %v393 = vadd.f32 %v385, %v388
    %v394 = vmax.f32 %v390, 0.0
    %v395 = vmax.f32 %v391, 0.0
    %v396 = vmax.f32 %v392, 0.0
    %v397 = vmax.f32 %v393, 0.0
    %v398 = vpack.c.bf16 %v395, %v394
    %v399 = vpack.c.bf16 %v397, %v396
    %v400 = vld [vmem:[#allocation8] sm:$0xff]
    %v401 = vld [vmem:[#allocation8 + $0x8] sm:$0xf]
    %v402 = vld [vmem:[#allocation8 + $0xc] sm:$0xff]
    %v403 = vld [vmem:[#allocation8 + $0x14] sm:$0xf]
    %v404 = vld [vmem:[#allocation8 + $0x18] sm:$0xff]
    %v405 = vld [vmem:[#allocation8 + $0x20] sm:$0xf]
    %v406 = vld [vmem:[#allocation8 + $0x24] sm:$0xff]
    %v407 = vld [vmem:[#allocation8 + $0x2c] sm:$0xf]
    %v408 = vld [vmem:[#allocation8 + $0x30] sm:$0xff]
    %v409 = vld [vmem:[#allocation8 + $0x38] sm:$0xf]
    %v410 = vld [vmem:[#allocation8 + $0x3c] sm:$0xff]
    %v411 = vld [vmem:[#allocation8 + $0x44] sm:$0xf]
    %v412 = vld [vmem:[#allocation8 + $0x48] sm:$0xff]
    %v413 = vld [vmem:[#allocation8 + $0x50] sm:$0xf]
    %v414 = vld [vmem:[#allocation8 + $0x54] sm:$0xff]
    %v415 = vld [vmem:[#allocation8 + $0x5c] sm:$0xf]
    %v416 = vld [vmem:[#allocation8 + $0x60] sm:$0xff]
    %v417 = vld [vmem:[#allocation8 + $0x68] sm:$0xf]
    %v418 = vld [vmem:[#allocation8 + $0x6c] sm:$0xff]
    %v419 = vld [vmem:[#allocation8 + $0x74] sm:$0xf]
    %v420 = vld [vmem:[#allocation8 + $0x78] sm:$0xff]
    %v421 = vld [vmem:[#allocation8 + $0x80] sm:$0xf]
    %v422 = vld [vmem:[#allocation8 + $0x84] sm:$0xff]
    %v423 = vld [vmem:[#allocation8 + $0x8c] sm:$0xf]
    %v424 = vld [vmem:[#allocation8 + $0x90] sm:$0xff]
    %v425 = vld [vmem:[#allocation8 + $0x98] sm:$0xf]
    %v426 = vld [vmem:[#allocation8 + $0x9c] sm:$0xff]
    %v427 = vld [vmem:[#allocation8 + $0xa4] sm:$0xf]
    %v428 = vld [vmem:[#allocation8 + $0xa8] sm:$0xff]
    %v429 = vld [vmem:[#allocation8 + $0xb0] sm:$0xf]
    %v430 = vld [vmem:[#allocation8 + $0xb4] sm:$0xff]
    %v431 = vld [vmem:[#allocation8 + $0xbc] sm:$0xf]
    %v464 = vunpack.c.l.b16 %v400
    %v465 = vunpack.c.h.b16 %v400
    %v466 = vunpack.c.l.b16 %v401
    %v467 = vunpack.c.l.b16 %v402
    %v468 = vunpack.c.h.b16 %v402
    %v469 = vunpack.c.l.b16 %v403
    %v470 = vunpack.c.l.b16 %v404
    %v471 = vunpack.c.h.b16 %v404
    %v472 = vunpack.c.l.b16 %v405
    %v473 = vunpack.c.l.b16 %v406
    %v474 = vunpack.c.h.b16 %v406
    %v475 = vunpack.c.l.b16 %v407
    %v476 = vunpack.c.l.b16 %v408
    %v477 = vunpack.c.h.b16 %v408
    %v478 = vunpack.c.l.b16 %v409
    %v479 = vunpack.c.l.b16 %v410
    %v480 = vunpack.c.h.b16 %v410
    %v481 = vunpack.c.l.b16 %v411
    %v482 = vunpack.c.l.b16 %v412
    %v483 = vunpack.c.h.b16 %v412
    %v484 = vunpack.c.l.b16 %v413
    %v485 = vunpack.c.l.b16 %v414
    %v486 = vunpack.c.h.b16 %v414
    %v487 = vunpack.c.l.b16 %v415
    %v488 = vunpack.c.l.b16 %v416
    %v489 = vunpack.c.h.b16 %v416
    %v490 = vunpack.c.l.b16 %v417
    %v491 = vunpack.c.l.b16 %v418
    %v492 = vunpack.c.h.b16 %v418
    %v493 = vunpack.c.l.b16 %v419
    %v494 = vunpack.c.l.b16 %v420
    %v495 = vunpack.c.h.b16 %v420
    %v496 = vunpack.c.l.b16 %v421
    %v497 = vunpack.c.l.b16 %v422
    %v498 = vunpack.c.h.b16 %v422
    %v499 = vunpack.c.l.b16 %v423
    %v500 = vunpack.c.l.b16 %v424
    %v501 = vunpack.c.h.b16 %v424
    %v502 = vunpack.c.l.b16 %v425
    %v503 = vunpack.c.l.b16 %v426
    %v504 = vunpack.c.h.b16 %v426
    %v505 = vunpack.c.l.b16 %v427
    %v506 = vunpack.c.l.b16 %v428
    %v507 = vunpack.c.h.b16 %v428
    %v508 = vunpack.c.l.b16 %v429
    %v509 = vunpack.c.l.b16 %v430
    %v510 = vunpack.c.h.b16 %v430
    %v511 = vunpack.c.l.b16 %v431
    %v512 = vpack.c.b16 %v467, %v464
    %v513 = vpack.c.b16 %v468, %v465
    %v514 = vpack.c.b16 %v469, %v466
    %v515 = vpack.c.b16 %v473, %v470
    %v516 = vpack.c.b16 %v474, %v471
    %v517 = vpack.c.b16 %v475, %v472
    %v518 = vpack.c.b16 %v479, %v476
    %v519 = vpack.c.b16 %v480, %v477
    %v520 = vpack.c.b16 %v481, %v478
    %v521 = vpack.c.b16 %v485, %v482
    %v522 = vpack.c.b16 %v486, %v483
    %v523 = vpack.c.b16 %v487, %v484
    %v524 = vpack.c.b16 %v491, %v488
    %v525 = vpack.c.b16 %v492, %v489
    %v526 = vpack.c.b16 %v493, %v490
    %v527 = vpack.c.b16 %v497, %v494
    %v528 = vpack.c.b16 %v498, %v495
    %v529 = vpack.c.b16 %v499, %v496
    %v530 = vpack.c.b16 %v503, %v500
    %v531 = vpack.c.b16 %v504, %v501
    %v532 = vpack.c.b16 %v505, %v502
    %v533 = vpack.c.b16 %v509, %v506
    %v534 = vpack.c.b16 %v510, %v507
    %v535 = vpack.c.b16 %v511, %v508
    %560 = vmatpush.bf16.msra.mxu0 %v533
    %561 = vmatpush.bf16.msra.mxu0 %v530
    %562 = vmatpush.bf16.msra.mxu0 %v527
    %563 = vmatpush.bf16.msra.mxu0 %v524
    %564 = vmatpush.bf16.msra.mxu0 %v521
    %565 = vmatpush.bf16.msra.mxu0 %v518
    %566 = vmatpush.bf16.msra.mxu0 %v515
    %567 = vmatpush.bf16.msra.mxu0 %v512
    %568 = vmatmul.bf16.gmra.mxu0 %v398
    %v569 = vpop.f32.mrf.mxu0
    %v570 = vadd.f32 0.0, %v569
    %v571 = vpop.f32.mrf.mxu0
    %v572 = vadd.f32 0.0, %v571
    %573 = vmatmul.bf16.gmra.mxu0 %v399
    %v574 = vpop.f32.mrf.mxu0
    %v575 = vadd.f32 0.0, %v574
    %v576 = vpop.f32.mrf.mxu0
    %v577 = vadd.f32 0.0, %v576
    %578 = vdwg.mxu0
    %579 = vmatpush.bf16.msra.mxu0 %v534
    %580 = vmatpush.bf16.msra.mxu0 %v531
    %581 = vmatpush.bf16.msra.mxu0 %v528
    %582 = vmatpush.bf16.msra.mxu0 %v525
    %583 = vmatpush.bf16.msra.mxu0 %v522
    %584 = vmatpush.bf16.msra.mxu0 %v519
    %585 = vmatpush.bf16.msra.mxu0 %v516
    %586 = vmatpush.bf16.msra.mxu0 %v513
    %587 = vmatmul.bf16.gmra.mxu0 %v398
    %v588 = vpop.f32.mrf.mxu0
    %v589 = vadd.f32 0.0, %v588
    %v590 = vpop.f32.mrf.mxu0
    %v591 = vadd.f32 0.0, %v590
    %592 = vmatmul.bf16.gmra.mxu0 %v399
    %v593 = vpop.f32.mrf.mxu0
    %v594 = vadd.f32 0.0, %v593
    %v595 = vpop.f32.mrf.mxu0
    %v596 = vadd.f32 0.0, %v595
    %597 = vdwg.mxu0
    %598 = vmatpush.bf16.msra.mxu0 %v535
    %599 = vmatpush.bf16.msra.mxu0 %v532
    %600 = vmatpush.bf16.msra.mxu0 %v529
    %601 = vmatpush.bf16.msra.mxu0 %v526
    %602 = vmatpush.bf16.msra.mxu0 %v523
    %603 = vmatpush.bf16.msra.mxu0 %v520
    %604 = vmatpush.bf16.msra.mxu0 %v517
    %605 = vmatpush.bf16.msra.mxu0 %v514
    %606 = vmatmul.bf16.gmra.mxu0 %v398
    %v607 = vpop.f32.mrf.mxu0
    %v608 = vadd.f32 0.0, %v607
    %v609 = vpop.f32.mrf.mxu0
    %v610 = vadd.f32 0.0, %v609
    %611 = vmatmul.bf16.gmra.mxu0 %v399
    %v612 = vpop.f32.mrf.mxu0
    %v613 = vadd.f32 0.0, %v612
    %v614 = vpop.f32.mrf.mxu0
    %v615 = vadd.f32 0.0, %v614
    %616 = vdwg.mxu0
    %v617 = vrot.slane %v570, 7
    %v618 = vrot.slane %v572, 7
    %v619 = vrot.slane %v575, 7
    %v620 = vrot.slane %v577, 7
    %v621 = vsel %vm356, %v619, %v620
    %v622 = vsel %vm356, %v618, %v619
    %v623 = vsel %vm356, %v617, %v618
    %v624 = vsel %vm356, %v620, %v617
    %v625 = vsel %vm163, %v624, 0.0
    %v626 = vsel %vm164, %v623, 0.0
    %v627 = vsel %vm165, %v622, 0.0
    %v628 = vsel %vm166, %v621, 0.0
    %v629 = vrot.slane %v608, 1
    %v630 = vrot.slane %v610, 1
    %v631 = vrot.slane %v613, 1
    %v632 = vrot.slane %v615, 1
    %v633 = vsel %vm369, %v631, %v632
    %v634 = vsel %vm369, %v630, %v631
    %v635 = vsel %vm369, %v629, %v630
    %v636 = vsel %vm369, %v632, %v629
    %v637 = vsel %vm167, %v635, 0.0
    %v638 = vsel %vm168, %v634, 0.0
    %v639 = vsel %vm169, %v633, 0.0
    %v640 = vsel %vm170, %v636, 0.0
    %v641 = vadd.f32 %v625, %v589
    %v642 = vadd.f32 %v626, %v591
    %v643 = vadd.f32 %v627, %v594
    %v644 = vadd.f32 %v628, %v596
    %v645 = vadd.f32 %v641, %v637
    %v646 = vadd.f32 %v642, %v638
    %v647 = vadd.f32 %v643, %v639
    %v648 = vadd.f32 %v644, %v640
    %v649 = vadd.f32 %v343, %v645
    %v650 = vadd.f32 %v345, %v646
    %v651 = vadd.f32 %v348, %v647
    %v652 = vadd.f32 %v350, %v648
    %653 = vst [vmem:[#allocation10] sm:$0xff] %v649
    %654 = vst [vmem:[#allocation10 + $0x8] sm:$0xff] %v650
    %655 = vst [vmem:[#allocation10 + $0x10] sm:$0xff] %v651
    %656 = vst [vmem:[#allocation10 + $0x18] sm:$0xff] %v652
    // Predicated region
    $region42: #{tpu_custom_call.1} parent=1 // pred_check
      _
    $region43: #{tpu_custom_call.1} parent=1 // pred_check_branch
      %658 = sbr.rel (0) target = $region45
    $region44: #{tpu_custom_call.1} parent=1 // pred_region
      %660 = vsyncadd [#allocation4], 0
      %s661 = sshll.u32 [#allocation10], 4
      %s662 = int_to_ptr.vmem [resolvable:$true] %s661
      %s663 = sshll.u32 %s6, 4
      %s664 = int_to_ptr.hbm [resolvable:$true] %s663
      %669 = dma.vmem_to_hbm [thread:$0]  %s662, 512, %s664, [#allocation4], 128, 128, 8
    $region45: #{tpu_custom_call.1} parent=1 // pred_fallthru
      _
    // Predicated region
    $region46: #{tpu_custom_call.1} parent=1 // pred_check
      _
    $region47: #{tpu_custom_call.1} parent=1 // pred_check_branch
      %671 = sbr.rel (0) target = $region49
    $region48: #{tpu_custom_call.1} parent=1 // pred_region
      %673 = dma.done [#allocation4], 512
    $region49: #{tpu_custom_call.1} parent=1 // pred_fallthru
      _
    %674 = vsyncpa [#allocation3], 1
    %675 = vsyncpa [#allocation6], 1
    %676 = vsyncpa [#allocation9], 1
    %677 = vsyncpa [#allocation4], 1

</llo_original>
